<compile_context>
chip_gen: v5e
topology: v5e:2x2
jax: 0.10.0
libtpu: 0.0.40
codegen_flags: <defaults>
</compile_context>

<pallas_src>
import jax
import jax.numpy as jnp
from jax.experimental import pallas as pl
from jax.experimental.pallas import tpu as pltpu


def mos_kernel(bias_ref, frames_ref, wfeat_ref, wlin_ref, out_ref):
    # bias_ref  : (1,)      SMEM  f32   (nn.Linear bias)
    # frames_ref: (B*T, F)  VMEM  f32   (framed waveform)
    # wfeat_ref : (F, D)    VMEM  f32   (SSL feature-extractor stub weight)
    # wlin_ref  : (1, D)    VMEM  f32   (nn.Linear(feature_dim, 1).weight)
    # out_ref   : (1, B)    VMEM  f32   (lane-dense utterance scores)
    bt, f = frames_ref.shape
    b = out_ref.shape[1]
    t = bt // b

    # Time-mean folded into the LHS (sublane-group mean; exact only while the
    # SSL stub is linear).  T=8 frames map to one f32 sublane group, so the
    # reshape is layout-free.
    frames_mean = jnp.mean(frames_ref[...].reshape(b, t, f), axis=1)      # (B, F)

    # "SSL" features of the mean frame: one small MXU matmul, f32 throughout.
    feats_mean = jnp.dot(frames_mean, wfeat_ref[...],
                         preferred_element_type=jnp.float32)              # (B, D)

    # Final Linear as an NT contraction -> lane-dense (1, B) output row.
    scores = jax.lax.dot_general(
        wlin_ref[...], feats_mean,
        dimension_numbers=(((1,), (1,)), ((), ())),
        preferred_element_type=jnp.float32)                               # (1, B)

    out_ref[...] = scores + bias_ref[0]


def prepare_mos_params(w_feat, w_lin, bias):
    """One-time weight preparation (call at model init, NOT per inference)."""
    d = w_feat.shape[1]
    wfeat_f32 = w_feat.astype(jnp.float32)                 # (F, D)
    wlin_row = w_lin.astype(jnp.float32).reshape(1, d)     # (1, D)
    bias1d = bias.astype(jnp.float32).reshape(1)           # (1,)
    return wfeat_f32, wlin_row, bias1d


def mos_predictor(audio, wfeat_f32, wlin_row, bias1d, frame_len=128):
    """audio: (B, 1, L) f32; weights from prepare_mos_params.
    Returns (B,) utterance scores."""
    b = audio.shape[0]
    f = frame_len
    assert audio.shape[2] % f == 0, "waveform length must be a multiple of frame_len"
    t = audio.shape[2] // f

    # Framing: contiguous (B,1,L) -> (B*T, F) is a pure metadata reshape (no cast).
    frames = audio.reshape(b * t, f)

    # Gridless single-program kernel: whole-array VMEM blocks, SMEM scalar bias.
    # TODO(synk): at realistic SSL sizes add a parallel grid axis over B*T row
    # tiles (dimension_semantics=("parallel",)) so v7x's second TC is used.
    out = pl.pallas_call(
        mos_kernel,
        out_shape=jax.ShapeDtypeStruct((1, b), jnp.float32),
        in_specs=[
            pl.BlockSpec(memory_space=pltpu.MemorySpace.SMEM),  # bias scalar
            pl.BlockSpec(memory_space=pltpu.MemorySpace.VMEM),  # framed audio
            pl.BlockSpec(memory_space=pltpu.MemorySpace.VMEM),  # SSL-stub weight
            pl.BlockSpec(memory_space=pltpu.MemorySpace.VMEM),  # linear weight row
        ],
        out_specs=pl.BlockSpec(memory_space=pltpu.MemorySpace.VMEM),
    )(bias1d, frames, wfeat_f32, wlin_row)

    return out[0]   # (B,) utterance scores


def mos_ref(audio, w_feat, w_lin, bias, frame_len=128):
    """Pure-JAX reference matching the torch forward (mean-after-Linear), f32."""
    b = audio.shape[0]
    f = frame_len
    t = audio.shape[2] // f
    frames = audio[:, 0, :].reshape(b, t, f)
    feats = jnp.einsum("btf,fd->btd", frames, w_feat,
                       preferred_element_type=jnp.float32)               # (B, T, D)
    frame_score = (feats @ w_lin.astype(jnp.float32).T)[..., 0] + bias[0]  # (B, T)
    return jnp.mean(frame_score, axis=1)                                  # (B,)


if __name__ == "__main__":
    key = jax.random.PRNGKey(0)
    k1, k2, k3, k4 = jax.random.split(key, 4)

    # Small, MXU/vreg-friendly shapes consistent with the module's forward.
    B, T, F, D = 2, 8, 128, 256   # batch, frames, frame length, "SSL" feature dim
    L = T * F                     # raw waveform length (audio.shape[2])

    audio = jax.random.normal(k1, (B, 1, L), jnp.float32)
    w_feat = jax.random.normal(k2, (F, D), jnp.float32) * (1.0 / jnp.sqrt(F))
    w_lin = jax.random.normal(k3, (1, D), jnp.float32) * (1.0 / jnp.sqrt(D))
    bias = jax.random.normal(k4, (1,), jnp.float32)

    # One-time init (out of the per-call path).
    wfeat_f32, wlin_row, bias1d = prepare_mos_params(w_feat, w_lin, bias)

    utt = mos_predictor(audio, wfeat_f32, wlin_row, bias1d)
    jax.block_until_ready(utt)

    ref = mos_ref(audio, w_feat, w_lin, bias)
    assert utt.shape == (B,), utt.shape
    assert jnp.allclose(utt, ref, rtol=1e-3, atol=1e-3), (utt, ref)

    print("KERNEL_OK")
</pallas_src>

<mosaic_0001>
module attributes {stable_mosaic.version = 11 : i64} {
  func.func @mos_kernel(%arg0: memref<1xf32, #tpu.memory_space<smem>>, %arg1: memref<16x128xf32, #tpu.memory_space<vmem>>, %arg2: memref<128x256xf32, #tpu.memory_space<vmem>>, %arg3: memref<1x256xf32, #tpu.memory_space<vmem>>, %arg4: memref<1x2xf32, #tpu.memory_space<vmem>>) attributes {dimension_semantics = [], scalar_prefetch = 0 : i64, scratch_operands = 0 : i64, tpu.core_type = #tpu.core_type<tc>} {
    %c0 = arith.constant 0 : index
    %c0_0 = arith.constant 0 : index
    %0 = vector.load %arg1[%c0, %c0_0] : memref<16x128xf32, #tpu.memory_space<vmem>>, vector<16x128xf32>
    %1 = vector.shape_cast %0 : vector<16x128xf32> to vector<2x8x128xf32>
    %cst = arith.constant dense<0.000000e+00> : vector<2x128xf32>
    %2 = vector.multi_reduction <add>, %1, %cst [1] : vector<2x8x128xf32> to vector<2x128xf32>
    %cst_1 = arith.constant 8.000000e+00 : f32
    %3 = vector.broadcast %cst_1 : f32 to vector<2x128xf32>
    %4 = arith.divf %2, %3 : vector<2x128xf32>
    %c0_2 = arith.constant 0 : index
    %c0_3 = arith.constant 0 : index
    %5 = vector.load %arg2[%c0_2, %c0_3] : memref<128x256xf32, #tpu.memory_space<vmem>>, vector<128x256xf32>
    %cst_4 = arith.constant dense<0.000000e+00> : vector<2x256xf32>
    %6 = tpu.matmul %4, %5, %cst_4 {dimension_numbers = #tpu.dot_dimension_numbers<[1], [0], [0], [1], [0, 0, 1, 1], [], []>} : vector<2x128xf32>, vector<128x256xf32>, vector<2x256xf32> -> vector<2x256xf32>
    %c0_5 = arith.constant 0 : index
    %c0_6 = arith.constant 0 : index
    %7 = vector.load %arg3[%c0_5, %c0_6] : memref<1x256xf32, #tpu.memory_space<vmem>>, vector<1x256xf32>
    %cst_7 = arith.constant dense<0.000000e+00> : vector<1x2xf32>
    %8 = tpu.matmul %7, %6, %cst_7 {dimension_numbers = #tpu.dot_dimension_numbers<[1], [1], [0], [0], [0, 0, 1, 0], [], []>} : vector<1x256xf32>, vector<2x256xf32>, vector<1x2xf32> -> vector<1x2xf32>
    %c0_8 = arith.constant 0 : index
    %9 = memref.load %arg0[%c0_8] : memref<1xf32, #tpu.memory_space<smem>>
    %10 = vector.broadcast %9 : f32 to vector<1x2xf32>
    %11 = arith.addf %8, %10 : vector<1x2xf32>
    %c0_9 = arith.constant 0 : index
    %c0_10 = arith.constant 0 : index
    %12 = vector.load %arg4[%c0_9, %c0_10] : memref<1x2xf32, #tpu.memory_space<vmem>>, vector<1x2xf32>
    tpu.vector_store %arg4[%c0_9, %c0_10], %11 {strides = array<i32>} : memref<1x2xf32, #tpu.memory_space<vmem>>, vector<1x2xf32>,
    return
  }
}

</mosaic_0001>

<llo_original>
// kernel: tpu_custom_call.1
$region0: #{tpu_custom_call.1}
  #allocation0 [shape = 'u32[]', space=smem, size = 0x4, offset = 0x4, fixed_abs, tag = 'smem constant byte address 0x4 - core index']
  #allocation1 [shape = 'u32[72,128]{1,0:T(1,128)}', space=vmem, size = 0x9000, scoped, tag = 'internal scratch']
  #allocation2 [shape = 'f32[1]{0:T(128)S(6)}', space=smem, size = 0x200, scoped, tag = 'scoped memory for tpu_custom_call.1']
  %s0 = inlined_call_operand.<no memory space> [shape: f32[1], index: 0, kind: input, shape index: {}]
  %s1 = inlined_call_operand.hbm [shape: f32[16,128], index: 1, kind: input, shape index: {}]
  %s2 = inlined_call_operand.hbm [shape: f32[128,256], index: 2, kind: input, shape index: {}]
  %s3 = inlined_call_operand.vmem [shape: f32[1,256], index: 3, kind: input, shape index: {}]
  %s4 = inlined_call_operand.hbm [shape: f32[1,2], index: 4, kind: output, shape index: {}]
  %s5 = sld [smem:[#allocation0]]
  $region34: #{tpu_custom_call.1} parent=0
    _
  %s7 = ssub.s32 1, %s5
  %s8 = scalar_select 0, %s7, %s5
  %9 = sst [smem:[#allocation2]] %s0
  $region1: #{tpu_custom_call.1} parent=0
    #allocation3 [shape = 'u8[8192]{0}', space=vmem, size = 0x2000, scoped, tag = 'input window, operand 1, single buffered']
    #allocation4 [shape = 's32[1]{0}', space=sflag, size = 0x4, scoped, tag = 'scoped memory for tpu_custom_call.1']
    #allocation5 [shape = 's32[1]{0}', space=sflag, size = 0x4, scoped, tag = 'scoped memory for tpu_custom_call.1']
    #allocation6 [shape = 'u8[131072]{0}', space=vmem, size = 0x20000, scoped, tag = 'input window, operand 2, single buffered']
    #allocation7 [shape = 's32[1]{0}', space=sflag, size = 0x4, scoped, tag = 'scoped memory for tpu_custom_call.1']
    #allocation8 [shape = 'u8[512]{0}', space=vmem, size = 0x400, scoped, tag = 'output window, operand 0, single buffered']
    %10 = vsyncpa [#allocation4], 0
    %11 = vsyncpa [#allocation7], 0
    %12 = vsyncpa [#allocation5], 0
    // Predicated region
    $region2: #{tpu_custom_call.1} parent=1 // pred_check
      _
    $region3: #{tpu_custom_call.1} parent=1 // pred_check_branch
      %14 = sbr.rel (0) target = $region5
    $region4: #{tpu_custom_call.1} parent=1 // pred_region
      _
    $region5: #{tpu_custom_call.1} parent=1 // pred_fallthru
      _
    // Predicated region
    $region6: #{tpu_custom_call.1} parent=1 // pred_check
      _
    $region7: #{tpu_custom_call.1} parent=1 // pred_check_branch
      %16 = sbr.rel (0) target = $region9
    $region8: #{tpu_custom_call.1} parent=1 // pred_region
      %18 = vsyncadd [#allocation4], 0
      %s19 = sshll.u32 %s1, 4
      %s20 = int_to_ptr.hbm [resolvable:$true] %s19
      %s21 = sshll.u32 [#allocation3], 4
      %s22 = int_to_ptr.vmem [resolvable:$true] %s21
      %27 = dma.hbm_to_vmem [thread:$0]  %s20, 256, %s22, [#allocation4], 128, 128, 8
    $region9: #{tpu_custom_call.1} parent=1 // pred_fallthru
      _
    // Predicated region
    $region10: #{tpu_custom_call.1} parent=1 // pred_check
      _
    $region11: #{tpu_custom_call.1} parent=1 // pred_check_branch
      %29 = sbr.rel (0) target = $region13
    $region12: #{tpu_custom_call.1} parent=1 // pred_region
      %31 = vsyncadd [#allocation7], 0
      %s32 = sshll.u32 %s2, 4
      %s33 = int_to_ptr.hbm [resolvable:$true] %s32
      %s34 = sshll.u32 [#allocation6], 4
      %s35 = int_to_ptr.vmem [resolvable:$true] %s34
      %40 = dma.hbm_to_vmem [thread:$0]  %s33, 4096, %s35, [#allocation7], 256, 256, 16
    $region13: #{tpu_custom_call.1} parent=1 // pred_fallthru
      _
    // Predicated region
    $region14: #{tpu_custom_call.1} parent=1 // pred_check
      _
    $region15: #{tpu_custom_call.1} parent=1 // pred_check_branch
      %42 = sbr.rel (0) target = $region17
    $region16: #{tpu_custom_call.1} parent=1 // pred_region
      _
    $region17: #{tpu_custom_call.1} parent=1 // pred_fallthru
      _
    // Predicated region
    $region18: #{tpu_custom_call.1} parent=1 // pred_check
      _
    $region19: #{tpu_custom_call.1} parent=1 // pred_check_branch
      %44 = sbr.rel (0) target = $region21
    $region20: #{tpu_custom_call.1} parent=1 // pred_region
      %46 = dma.done [#allocation4], 256
    $region21: #{tpu_custom_call.1} parent=1 // pred_fallthru
      _
    // Predicated region
    $region22: #{tpu_custom_call.1} parent=1 // pred_check
      _
    $region23: #{tpu_custom_call.1} parent=1 // pred_check_branch
      %48 = sbr.rel (0) target = $region25
    $region24: #{tpu_custom_call.1} parent=1 // pred_region
      %50 = dma.done [#allocation7], 4096
    $region25: #{tpu_custom_call.1} parent=1 // pred_fallthru
      _
    %v51 = vld [vmem:[#allocation3] sm:$0xff]
    %v52 = vld [vmem:[#allocation3 + $0x8] sm:$0xff]
    %v53 = vrot.slane %v51, 4
    %v54 = vadd.f32 %v51, %v53
    %v55 = vrot.slane %v54, 2
    %v56 = vadd.f32 %v54, %v55
    %v57 = vrot.slane %v56, 1
    %v58 = vadd.f32 %v56, %v57
    %v59 = vrot.slane %v52, 4
    %v60 = vadd.f32 %v52, %v59
    %v61 = vrot.slane %v60, 2
    %v62 = vadd.f32 %v60, %v61
    %v63 = vrot.slane %v62, 1
    %v64 = vadd.f32 %v62, %v63
    %v65 = vrcp.pop 8.0
    %v66 = vmul.f32 8.0, %v65
    %v67 = vsub.f32 1.0, %v66
    %v68 = vmul.f32 %v65, %v67
    %v69 = vadd.f32 %v65, %v68
    %vm70 = vweird.f32 %v65
    %v71 = vsel %vm70, %v65, %v69
    %v72 = vmul.f32 %v58, %v71
    %v73 = vmul.f32 %v64, %v71
    %v74 = vld [vmem:[#allocation6] sm:$0xff]
    %v75 = vld [vmem:[#allocation6 + $0x8] sm:$0xff]
    %v76 = vld [vmem:[#allocation6 + $0x10] sm:$0xff]
    %v77 = vld [vmem:[#allocation6 + $0x18] sm:$0xff]
    %v78 = vld [vmem:[#allocation6 + $0x20] sm:$0xff]
    %v79 = vld [vmem:[#allocation6 + $0x28] sm:$0xff]
    %v80 = vld [vmem:[#allocation6 + $0x30] sm:$0xff]
    %v81 = vld [vmem:[#allocation6 + $0x38] sm:$0xff]
    %v82 = vld [vmem:[#allocation6 + $0x40] sm:$0xff]
    %v83 = vld [vmem:[#allocation6 + $0x48] sm:$0xff]
    %v84 = vld [vmem:[#allocation6 + $0x50] sm:$0xff]
    %v85 = vld [vmem:[#allocation6 + $0x58] sm:$0xff]
    %v86 = vld [vmem:[#allocation6 + $0x60] sm:$0xff]
    %v87 = vld [vmem:[#allocation6 + $0x68] sm:$0xff]
    %v88 = vld [vmem:[#allocation6 + $0x70] sm:$0xff]
    %v89 = vld [vmem:[#allocation6 + $0x78] sm:$0xff]
    %v90 = vld [vmem:[#allocation6 + $0x80] sm:$0xff]
    %v91 = vld [vmem:[#allocation6 + $0x88] sm:$0xff]
    %v92 = vld [vmem:[#allocation6 + $0x90] sm:$0xff]
    %v93 = vld [vmem:[#allocation6 + $0x98] sm:$0xff]
    %v94 = vld [vmem:[#allocation6 + $0xa0] sm:$0xff]
    %v95 = vld [vmem:[#allocation6 + $0xa8] sm:$0xff]
    %v96 = vld [vmem:[#allocation6 + $0xb0] sm:$0xff]
    %v97 = vld [vmem:[#allocation6 + $0xb8] sm:$0xff]
    %v98 = vld [vmem:[#allocation6 + $0xc0] sm:$0xff]
    %v99 = vld [vmem:[#allocation6 + $0xc8] sm:$0xff]
    %v100 = vld [vmem:[#allocation6 + $0xd0] sm:$0xff]
    %v101 = vld [vmem:[#allocation6 + $0xd8] sm:$0xff]
    %v102 = vld [vmem:[#allocation6 + $0xe0] sm:$0xff]
    %v103 = vld [vmem:[#allocation6 + $0xe8] sm:$0xff]
    %v104 = vld [vmem:[#allocation6 + $0xf0] sm:$0xff]
    %v105 = vld [vmem:[#allocation6 + $0xf8] sm:$0xff]
    %vm108 = vcmask 1041409
    %v109 = vsel %vm108, %v73, %v72
    %111 = vmatpush.msra.mxu0 %v104
    %112 = vmatpush.msra.mxu0 %v102
    %113 = vmatpush.msra.mxu0 %v100
    %114 = vmatpush.msra.mxu0 %v98
    %115 = vmatpush.msra.mxu0 %v96
    %116 = vmatpush.msra.mxu0 %v94
    %117 = vmatpush.msra.mxu0 %v92
    %118 = vmatpush.msra.mxu0 %v90
    %119 = vmatpush.msra.mxu0 %v88
    %120 = vmatpush.msra.mxu0 %v86
    %121 = vmatpush.msra.mxu0 %v84
    %122 = vmatpush.msra.mxu0 %v82
    %123 = vmatpush.msra.mxu0 %v80
    %124 = vmatpush.msra.mxu0 %v78
    %125 = vmatpush.msra.mxu0 %v76
    %126 = vmatpush.msra.mxu0 %v74
    %127 = vmatmul.f32.gmra.mxu0 %v109
    %v128 = vpop.f32.mrf.mxu0
    %v129 = vadd.f32 0.0, %v128
    %130 = vdwg.mxu0
    %131 = vmatpush.msra.mxu0 %v105
    %132 = vmatpush.msra.mxu0 %v103
    %133 = vmatpush.msra.mxu0 %v101
    %134 = vmatpush.msra.mxu0 %v99
    %135 = vmatpush.msra.mxu0 %v97
    %136 = vmatpush.msra.mxu0 %v95
    %137 = vmatpush.msra.mxu0 %v93
    %138 = vmatpush.msra.mxu0 %v91
    %139 = vmatpush.msra.mxu0 %v89
    %140 = vmatpush.msra.mxu0 %v87
    %141 = vmatpush.msra.mxu0 %v85
    %142 = vmatpush.msra.mxu0 %v83
    %143 = vmatpush.msra.mxu0 %v81
    %144 = vmatpush.msra.mxu0 %v79
    %145 = vmatpush.msra.mxu0 %v77
    %146 = vmatpush.msra.mxu0 %v75
    %147 = vmatmul.f32.gmra.mxu0 %v109
    %v148 = vpop.f32.mrf.mxu0
    %v149 = vadd.f32 0.0, %v148
    %150 = vdwg.mxu0
    %v151 = vld [vmem:[%s3] sm:$0x3]
    %s152 = sld [smem:[#allocation2]]
    %v153 = vstv %s152
    %v155 = vperm.slane %v151, 0
    %v156 = vperm.slane %v151, 1
    %159 = vmatpush.xpose.msra.mxu0 0.0
    %160 = vmatpush.xpose.msra.mxu0 0.0
    %161 = vmatpush.xpose.msra.mxu0 0.0
    %162 = vmatpush.xpose.msra.mxu0 0.0
    %163 = vmatpush.xpose.msra.mxu0 0.0
    %164 = vmatpush.xpose.msra.mxu0 0.0
    %165 = vmatpush.xpose.msra.mxu0 0.0
    %166 = vmatpush.xpose.msra.mxu0 0.0
    %167 = vmatpush.xpose.msra.mxu0 0.0
    %168 = vmatpush.xpose.msra.mxu0 0.0
    %169 = vmatpush.xpose.msra.mxu0 0.0
    %170 = vmatpush.xpose.msra.mxu0 0.0
    %171 = vmatpush.xpose.msra.mxu0 0.0
    %172 = vmatpush.xpose.msra.mxu0 0.0
    %173 = vmatpush.xpose.msra.mxu0 0.0
    %174 = vmatpush.xpose.msra.mxu0 %v129
    %175 = vmatmul.f32.gmra.mxu0 %v155
    %v176 = vpop.f32.mrf.mxu0
    %v177 = vadd.f32 %v153, %v176
    %178 = vdwg.mxu0
    %179 = vmatpush.xpose.msra.mxu0 0.0
    %180 = vmatpush.xpose.msra.mxu0 0.0
    %181 = vmatpush.xpose.msra.mxu0 0.0
    %182 = vmatpush.xpose.msra.mxu0 0.0
    %183 = vmatpush.xpose.msra.mxu0 0.0
    %184 = vmatpush.xpose.msra.mxu0 0.0
    %185 = vmatpush.xpose.msra.mxu0 0.0
    %186 = vmatpush.xpose.msra.mxu0 0.0
    %187 = vmatpush.xpose.msra.mxu0 0.0
    %188 = vmatpush.xpose.msra.mxu0 0.0
    %189 = vmatpush.xpose.msra.mxu0 0.0
    %190 = vmatpush.xpose.msra.mxu0 0.0
    %191 = vmatpush.xpose.msra.mxu0 0.0
    %192 = vmatpush.xpose.msra.mxu0 0.0
    %193 = vmatpush.xpose.msra.mxu0 0.0
    %194 = vmatpush.xpose.msra.mxu0 %v149
    %195 = vmatmul.f32.gmra.mxu0 %v156
    %v196 = vpop.f32.mrf.mxu0
    %v197 = vadd.f32 %v177, %v196
    %198 = vdwg.mxu0
    %vm199 = vcmask 8192
    %200 = vst.msk [vmem:[#allocation8] sm:$0x1] %vm199, %v197
    // Predicated region
    $region26: #{tpu_custom_call.1} parent=1 // pred_check
      _
    $region27: #{tpu_custom_call.1} parent=1 // pred_check_branch
      %202 = sbr.rel (0) target = $region29
    $region28: #{tpu_custom_call.1} parent=1 // pred_region
      %204 = vsyncadd [#allocation5], 0
      %s206 = sshll.u32 [#allocation8], 4
      %s207 = int_to_ptr.vmem [resolvable:$true] %s206
      %s208 = sshll.u32 %s4, 4
      %s209 = int_to_ptr.hbm [resolvable:$true] %s208
      %211 = dma.vmem_to_hbm [thread:$0]  %s207, 16, %s209, [#allocation5]
    $region29: #{tpu_custom_call.1} parent=1 // pred_fallthru
      _
    // Predicated region
    $region30: #{tpu_custom_call.1} parent=1 // pred_check
      _
    $region31: #{tpu_custom_call.1} parent=1 // pred_check_branch
      %213 = sbr.rel (0) target = $region33
    $region32: #{tpu_custom_call.1} parent=1 // pred_region
      %215 = dma.done [#allocation5], 16
    $region33: #{tpu_custom_call.1} parent=1 // pred_fallthru
      _
    %216 = vsyncpa [#allocation4], 1
    %217 = vsyncpa [#allocation7], 1
    %218 = vsyncpa [#allocation5], 1

</llo_original>
